<compile_context>
chip_gen: v6e
topology: v6e:2x2x1
jax: 0.10.0
libtpu: 0.0.40
codegen_flags: <defaults>
</compile_context>

<pallas_src>
import functools

import jax
import jax.numpy as jnp
from jax import lax
from jax.experimental import pallas as pl
from jax.experimental.pallas import tpu as pltpu


def _round_up(x, m):
    return (x + m - 1) // m * m


# --------------------------------------------------------------------------- #
# Kernel 1: im2col matmul (stride-2 encoder layers)                            #
# --------------------------------------------------------------------------- #
def _matmul_bias_kernel(x_ref, w_ref, b_ref, o_ref, *, relu):
    """o = relu(w @ x + b) for one lane tile of one batch element.

    x_ref: (1, KC, Mt) bf16   im2col patches (contraction rows on sublanes)
    w_ref: (Cout, KC)  bf16
    b_ref: (Cout, 1)   f32
    o_ref: (1, Cout, Mt)
    """
    acc = jnp.dot(w_ref[...], x_ref[0], preferred_element_type=jnp.float32)
    acc = acc + b_ref[...]
    if relu:
        acc = jnp.maximum(acc, 0.0)
    o_ref[0] = acc.astype(o_ref.dtype)


def conv3d_stride2(x, w, b, *, relu=True, out_dtype=jnp.bfloat16):
    """'same'-padded stride-2 Conv3d via im2col + one Pallas MXU matmul.

    Only strided output positions are materialized (no 4x waste).
    x: (N, D, H, W, Cin), w: (K, K, K, Cin, Cout), b: (Cout,)
    """
    N, D, H, W, Cin = x.shape
    K = w.shape[0]
    Cout = w.shape[-1]
    p = K // 2
    s = 2
    Do = (D + 2 * p - K) // s + 1
    Ho = (H + 2 * p - K) // s + 1
    Wo = (W + 2 * p - K) // s + 1
    Mo = Do * Ho * Wo
    KC = K * K * K * Cin
    KCp = _round_up(KC, 16)          # zero-pad contraction to a clean bf16 pack

    xp = jnp.pad(x.astype(jnp.bfloat16),
                 ((0, 0), (p, p), (p, p), (p, p), (0, 0)))
    taps = []
    for kd in range(K):
        for kh in range(K):
            for kw in range(K):
                taps.append(xp[:, kd:kd + s * Do:s, kh:kh + s * Ho:s,
                               kw:kw + s * Wo:s, :])
    patches = jnp.stack(taps, axis=1)                     # (N, K^3, Do, Ho, Wo, Cin)
    patches = jnp.transpose(patches, (0, 1, 5, 2, 3, 4))  # (N, K^3, Cin, Do, Ho, Wo)
    patches = patches.reshape(N, KC, Mo)

    # lane tile chosen so the f32 accumulator (Cout x Mt) stays <= ~64 KiB
    mt_cap = max(128, ((16384 // max(Cout, 8)) // 128) * 128)
    Mt = min(mt_cap, _round_up(Mo, 128))
    Mop = _round_up(Mo, Mt)
    patches = jnp.pad(patches, ((0, 0), (0, KCp - KC), (0, Mop - Mo)))

    wt = jnp.transpose(w, (4, 0, 1, 2, 3)).reshape(Cout, KC)
    wt = jnp.pad(wt, ((0, 0), (0, KCp - KC))).astype(jnp.bfloat16)
    b2 = jnp.reshape(b, (Cout, 1)).astype(jnp.float32)

    out = pl.pallas_call(
        functools.partial(_matmul_bias_kernel, relu=relu),
        out_shape=jax.ShapeDtypeStruct((N, Cout, Mop), out_dtype),
        grid_spec=pltpu.PrefetchScalarGridSpec(
            num_scalar_prefetch=0,
            grid=(N, Mop // Mt),
            in_specs=[
                pl.BlockSpec((1, KCp, Mt), lambda n, m: (n, 0, m)),
                pl.BlockSpec((Cout, KCp), lambda n, m: (0, 0)),
                pl.BlockSpec((Cout, 1), lambda n, m: (0, 0)),
            ],
            out_specs=pl.BlockSpec((1, Cout, Mt), lambda n, m: (n, 0, m)),
        ),
        compiler_params=pltpu.CompilerParams(
            dimension_semantics=("parallel", "parallel")),
    )(patches, wt, b2)

    out = out[:, :, :Mo].reshape(N, Cout, Do, Ho, Wo)
    return jnp.transpose(out, (0, 2, 3, 4, 1))            # NDHWC


# --------------------------------------------------------------------------- #
# Kernel 2: flat-window plane conv (stride-1 decoder / head layers)            #
# --------------------------------------------------------------------------- #
def _conv_plane_kernel(x_ref, w_ref, b_ref, o_ref, *,
                       K, Cin, Wp, M, Mt, D_blk, relu):
    """D_blk output depth planes of a stride-1 'same' 3-D conv.

    x_ref: (1, Dp*Cin, Hp*Wp) bf16  depth-major / channel-minor rows on sublanes,
                                    flattened padded (H, W) plane on lanes
    w_ref: (K, K, Cout, K*Cin) bf16 kd folded into the contraction (kd-major)
    b_ref: (Cout, 1) f32
    o_ref: (1, D_blk, Cout, M)      M = H * Wp (junk columns W..Wp dropped outside)
    """
    od_base = pl.program_id(1) * D_blk
    kc = K * Cin

    def one_plane(od_local, carry):
        # first padded-input row of this output plane's receptive field
        row0 = pl.multiple_of((od_base + od_local) * Cin, Cin)
        for m0 in range(0, M, Mt):            # static lane-chunk loop (bounds vregs)
            mt = min(Mt, M - m0)
            acc = None
            for kh in range(K):               # kd already folded -> K^2 taps
                for kw in range(K):
                    off = kh * Wp + kw + m0   # flat-window trick: tap == lane offset
                    xt = x_ref[0, pl.ds(row0, kc), pl.ds(off, mt)]   # (K*Cin, mt)
                    d = jnp.dot(w_ref[kh, kw], xt,
                                preferred_element_type=jnp.float32)
                    acc = d if acc is None else acc + d
            acc = acc + b_ref[...]            # (Cout, 1) broadcast over lanes
            if relu:
                acc = jnp.maximum(acc, 0.0)
            o_ref[0, od_local, :, pl.ds(m0, mt)] = acc.astype(o_ref.dtype)
        return carry

    lax.fori_loop(0, D_blk, one_plane, 0, unroll=(D_blk * K * K <= 64))


def conv3d_same(x, w, b, *, relu=False, out_dtype=jnp.bfloat16):
    """Stride-1 'same'-padded Conv3d with fused bias / optional ReLU.

    x: (N, D, H, W, Cin), w: (K, K, K, Cin, Cout), b: (Cout,)
    Returns (N, D, H, W, Cout) in out_dtype.
    """
    N, D, H, W, Cin = x.shape
    K = w.shape[0]
    Cout = w.shape[-1]
    p = K // 2

    # flattened-plane geometry; widen Wp slightly on big planes so M = H*Wp is
    # lane-aligned (unmasked full-width stores)
    Wp = W + 2 * p
    if H * Wp >= 1024:
        cand = Wp
        while (H * cand) % 128 != 0 and cand < Wp + max(8, Wp // 4) + 1:
            cand += 1
        if (H * cand) % 128 == 0:
            Wp = cand
    Hp = H + 2 * p + 1            # +1 spare zero row keeps all flat windows in-bounds
    Dp = D + 2 * p
    HWp = Hp * Wp
    M = H * Wp

    # layout: pad, channels packed under depth on sublanes, (H, W) flattened to lanes
    xp = jnp.pad(x.astype(jnp.bfloat16),
                 ((0, 0), (p, p), (p, Hp - H - p), (p, Wp - W - p), (0, 0)))
    xf = jnp.transpose(xp, (0, 1, 4, 2, 3)).reshape(N, Dp * Cin, HWp)

    # weights with kd folded into the contraction: (kh, kw, Cout, kd*Cin)
    wt = jnp.transpose(w, (1, 2, 4, 0, 3)).reshape(K, K, Cout, K * Cin)
    wt = wt.astype(jnp.bfloat16)
    b2 = jnp.reshape(b, (Cout, 1)).astype(jnp.float32)

    # depth blocking: a handful of grid steps per batch element
    if D <= 10:
        D_blk = D
    else:
        D_blk = next(blk for blk in (10, 8, 5, 4, 2, 1) if D % blk == 0)
    n_dblk = D // D_blk

    # lane chunking so accumulator + per-tap operand stay register friendly
    if M <= 768:
        Mt = M
    else:
        Mt = next((c for c in (768, 640, 512, 384, 256, 128) if M % c == 0), 768)

    kernel = functools.partial(_conv_plane_kernel, K=K, Cin=Cin, Wp=Wp, M=M,
                               Mt=Mt, D_blk=D_blk, relu=relu)

    out_flat = pl.pallas_call(
        kernel,
        out_shape=jax.ShapeDtypeStruct((N, D, Cout, M), out_dtype),
        grid_spec=pltpu.PrefetchScalarGridSpec(
            num_scalar_prefetch=0,
            grid=(N, n_dblk),
            in_specs=[
                # whole padded volume of batch element n, resident across depth blocks
                pl.BlockSpec((1, Dp * Cin, HWp), lambda n, db: (n, 0, 0)),
                pl.BlockSpec((K, K, Cout, K * Cin), lambda n, db: (0, 0, 0, 0)),
                pl.BlockSpec((Cout, 1), lambda n, db: (0, 0)),
            ],
            out_specs=pl.BlockSpec((1, D_blk, Cout, M),
                                   lambda n, db: (n, db, 0, 0)),
        ),
        compiler_params=pltpu.CompilerParams(
            dimension_semantics=("parallel", "parallel")),
    )(xf, wt, b2)

    out = out_flat.reshape(N, D, Cout, H, Wp)[..., :W]     # drop junk columns
    return jnp.transpose(out, (0, 1, 3, 4, 2))             # NDHWC


# --------------------------------------------------------------------------- #
# Plain-JAX glue                                                               #
# --------------------------------------------------------------------------- #
def interpolate_nearest(x, size):
    """F.interpolate(x, size, mode='nearest') for NDHWC; src = floor(dst*in/out)."""
    _, D, H, W, _ = x.shape
    di = (jnp.arange(size) * D) // size
    hi = (jnp.arange(size) * H) // size
    wi = (jnp.arange(size) * W) // size
    return x[:, di][:, :, hi][:, :, :, wi]


def _conv3d_ref(x, w, b, stride=1):
    """f32 reference conv (PyTorch padding=K//2 semantics) for unit checks."""
    p = w.shape[0] // 2
    y = lax.conv_general_dilated(
        x.astype(jnp.float32), w.astype(jnp.float32),
        window_strides=(stride,) * 3, padding=[(p, p)] * 3,
        dimension_numbers=("NDHWC", "DHWIO", "NDHWC"))
    return y + b.astype(jnp.float32)


def _conv_params(key, k, cin, cout):
    kw, kb = jax.random.split(key)
    fan_in = cin * k * k * k
    bound = 1.0 / jnp.sqrt(jnp.float32(fan_in))
    w = jax.random.uniform(kw, (k, k, k, cin, cout), jnp.float32, -bound, bound)
    b = jax.random.uniform(kb, (cout,), jnp.float32, -bound, bound)
    return w, b


def init_params(key):
    ks = jax.random.split(key, 9)
    return {
        "enc1": _conv_params(ks[0], 5, 1, 16),
        "enc2": _conv_params(ks[1], 3, 16, 32),
        "enc3": _conv_params(ks[2], 3, 32, 64),
        "dec1": _conv_params(ks[3], 3, 64, 64),
        "dec2": _conv_params(ks[4], 3, 64, 32),
        "dec3": _conv_params(ks[5], 5, 32, 16),
        "qual": _conv_params(ks[6], 5, 16, 1),
        "rot": _conv_params(ks[7], 5, 16, 4),
        "width": _conv_params(ks[8], 5, 16, 1),
    }


def inference_conv_forward(params, x_ncdhw):
    # x_ncdhw: (N, 1, D, H, W) -> NDHWC
    x = jnp.transpose(x_ncdhw, (0, 2, 3, 4, 1)).astype(jnp.float32)

    # Encoder: stride-2 'same' convs + fused ReLU (im2col matmuls)  40 -> 20 -> 10 -> 5
    x = conv3d_stride2(x, *params["enc1"], relu=True)
    x = conv3d_stride2(x, *params["enc2"], relu=True)
    x = conv3d_stride2(x, *params["enc3"], relu=True)

    # Decoder: conv + fused ReLU (plane kernels) + nearest interpolate to 10 / 20 / 40
    x = interpolate_nearest(conv3d_same(x, *params["dec1"], relu=True), 10)
    x = interpolate_nearest(conv3d_same(x, *params["dec2"], relu=True), 20)
    x = interpolate_nearest(conv3d_same(x, *params["dec3"], relu=True), 40)

    # Heads fused into a single Cout=6 conv (one pass over the 40^3 feature map)
    wq, bq = params["qual"]
    wr, br = params["rot"]
    ww, bw = params["width"]
    w_h = jnp.concatenate([wq, wr, ww], axis=-1)          # (5,5,5,16,6)
    b_h = jnp.concatenate([bq, br, bw], axis=0)           # (6,)
    y = conv3d_same(x, w_h, b_h, relu=False, out_dtype=jnp.float32)

    qual = y[..., 0:1]
    rot = y[..., 1:5]
    width = y[..., 5:6]
    # F.normalize(dim=channel): v / max(||v||_2, 1e-12)
    nrm = jnp.sqrt(jnp.sum(rot * rot, axis=-1, keepdims=True))
    rot = rot / jnp.maximum(nrm, 1e-12)

    to_ncdhw = lambda t: jnp.transpose(t, (0, 4, 1, 2, 3))
    q, r, wd = to_ncdhw(qual), to_ncdhw(rot), to_ncdhw(width)
    return (q, r, wd, q, q)


if __name__ == "__main__":
    key = jax.random.PRNGKey(0)
    pkey, xkey, k1, k2 = jax.random.split(key, 4)
    params = init_params(pkey)

    # --- single-layer checks against lax.conv (loose tolerance for bf16 inputs) ---
    xs = jax.random.normal(k1, (2, 12, 12, 12, 1), jnp.float32)
    ws, bs = _conv_params(k2, 5, 1, 16)
    got = conv3d_stride2(xs, ws, bs, relu=False, out_dtype=jnp.float32)
    ref = _conv3d_ref(xs, ws, bs, stride=2)
    assert got.shape == ref.shape
    tol = 5e-2 * (float(jnp.max(jnp.abs(ref))) + 1.0)
    assert float(jnp.max(jnp.abs(got - ref))) < tol

    xs2 = jax.random.normal(k1, (2, 12, 12, 12, 16), jnp.float32)
    ws2, bs2 = _conv_params(k2, 5, 16, 6)
    got2 = conv3d_same(xs2, ws2, bs2, relu=False, out_dtype=jnp.float32)
    ref2 = _conv3d_ref(xs2, ws2, bs2, stride=1)
    assert got2.shape == ref2.shape
    tol2 = 5e-2 * (float(jnp.max(jnp.abs(ref2))) + 1.0)
    assert float(jnp.max(jnp.abs(got2 - ref2))) < tol2

    # --- full network on the canonical (N, 1, 40, 40, 40) TSDF input ---
    x = jax.random.normal(xkey, (2, 1, 40, 40, 40), jnp.float32)
    fwd = jax.jit(inference_conv_forward)
    outs = jax.block_until_ready(fwd(params, x))

    qual, rot, width, q2, q3 = outs
    assert qual.shape == (2, 1, 40, 40, 40)
    assert rot.shape == (2, 4, 40, 40, 40)
    assert width.shape == (2, 1, 40, 40, 40)
    assert q2.shape == qual.shape and q3.shape == qual.shape
    assert bool(jnp.all(jnp.isfinite(qual)))
    assert bool(jnp.all(jnp.isfinite(rot)))
    assert bool(jnp.all(jnp.isfinite(width)))
    # rot head is unit-normalized over the channel dim
    rn = jnp.sqrt(jnp.sum(rot * rot, axis=1))
    assert bool(jnp.all(jnp.abs(rn - 1.0) < 1e-3))

    print("KERNEL_OK")
</pallas_src>

<mosaic_0001>
module attributes {stable_mosaic.version = 11 : i64} {
  func.func @_matmul_bias_kernel(%arg0: i32, %arg1: i32, %arg2: memref<1x128x256xbf16, #tpu.memory_space<vmem>>, %arg3: memref<16x128xbf16, #tpu.memory_space<vmem>>, %arg4: memref<16x1xf32, #tpu.memory_space<vmem>>, %arg5: memref<1x16x256xf32, #tpu.memory_space<vmem>>) attributes {dimension_semantics = [#tpu.dimension_semantics<parallel>, #tpu.dimension_semantics<parallel>], iteration_bounds = array<i64: 2, 1>, scalar_prefetch = 0 : i64, scratch_operands = 0 : i64, tpu.core_type = #tpu.core_type<tc>, window_params = [{transform_indices = @transform_0, window_bounds = array<i64: 1, 128, 256>}, {pipeline_mode = #tpu.pipeline_mode<synchronous>, transform_indices = @transform_1, window_bounds = array<i64: 16, 128>}, {pipeline_mode = #tpu.pipeline_mode<synchronous>, transform_indices = @transform_2, window_bounds = array<i64: 16, 1>}, {transform_indices = @transform_3, window_bounds = array<i64: 1, 16, 256>}]} {
    %c0 = arith.constant 0 : index
    %c0_0 = arith.constant 0 : index
    %0 = vector.load %arg3[%c0, %c0_0] : memref<16x128xbf16, #tpu.memory_space<vmem>>, vector<16x128xbf16>
    %c0_1 = arith.constant 0 : index
    %c0_2 = arith.constant 0 : index
    %c0_3 = arith.constant 0 : index
    %1 = vector.load %arg2[%c0_1, %c0_2, %c0_3] : memref<1x128x256xbf16, #tpu.memory_space<vmem>>, vector<1x128x256xbf16>
    %2 = vector.shape_cast %1 : vector<1x128x256xbf16> to vector<128x256xbf16>
    %cst = arith.constant dense<0.000000e+00> : vector<16x256xf32>
    %3 = tpu.matmul %0, %2, %cst {dimension_numbers = #tpu.dot_dimension_numbers<[1], [0], [0], [1], [0, 0, 1, 1], [], []>} : vector<16x128xbf16>, vector<128x256xbf16>, vector<16x256xf32> -> vector<16x256xf32>
    %c0_4 = arith.constant 0 : index
    %c0_5 = arith.constant 0 : index
    %4 = vector.load %arg4[%c0_4, %c0_5] : memref<16x1xf32, #tpu.memory_space<vmem>>, vector<16x1xf32>
    %5 = vector.broadcast %4 : vector<16x1xf32> to vector<16x256xf32>
    %6 = arith.addf %3, %5 : vector<16x256xf32>
    %c0_6 = arith.constant 0 : index
    %c0_7 = arith.constant 0 : index
    %c0_8 = arith.constant 0 : index
    %7 = vector.load %arg5[%c0_6, %c0_7, %c0_8] : memref<1x16x256xf32, #tpu.memory_space<vmem>>, vector<1x16x256xf32>
    %8 = vector.shape_cast %7 : vector<1x16x256xf32> to vector<16x256xf32>
    %9 = vector.shape_cast %6 : vector<16x256xf32> to vector<1x16x256xf32>
    tpu.vector_store %arg5[%c0_6, %c0_7, %c0_8], %9 {strides = array<i32>} : memref<1x16x256xf32, #tpu.memory_space<vmem>>, vector<1x16x256xf32>,
    return
  }
  func.func @transform_0(%arg0: i32, %arg1: i32) -> (i32, i32, i32) {
    %c0_i32 = arith.constant 0 : i32
    %c0_i32_0 = arith.constant 0 : i32
    return %arg0, %c0_i32, %arg1 : i32, i32, i32
  }
  func.func @transform_1(%arg0: i32, %arg1: i32) -> (i32, i32) {
    %c0_i32 = arith.constant 0 : i32
    %c0_i32_0 = arith.constant 0 : i32
    %c0_i32_1 = arith.constant 0 : i32
    return %c0_i32, %c0_i32_0 : i32, i32
  }
  func.func @transform_2(%arg0: i32, %arg1: i32) -> (i32, i32) {
    %c0_i32 = arith.constant 0 : i32
    %c0_i32_0 = arith.constant 0 : i32
    %c0_i32_1 = arith.constant 0 : i32
    return %c0_i32, %c0_i32_0 : i32, i32
  }
  func.func @transform_3(%arg0: i32, %arg1: i32) -> (i32, i32, i32) {
    %c0_i32 = arith.constant 0 : i32
    %c0_i32_0 = arith.constant 0 : i32
    return %arg0, %c0_i32, %arg1 : i32, i32, i32
  }
}

</mosaic_0001>

<llo_original>
// kernel: tpu_custom_call.1
$region0: #{tpu_custom_call.1}
  #allocation0 [shape = 'u32[]', space=smem, size = 0x4, offset = 0x4, fixed_abs, tag = 'smem constant byte address 0x4 - core index']
  #allocation1 [shape = 'u32[144,128]{1,0:T(1,128)}', space=vmem, size = 0x12000, scoped, tag = 'internal scratch']
  %s0 = inlined_call_operand.hbm [shape: bf16[2,128,256], index: 0, kind: input, shape index: {}]
  %s1 = inlined_call_operand.vmem [shape: bf16[16,128], index: 1, kind: input, shape index: {}]
  %s2 = inlined_call_operand.vmem [shape: f32[16,1], index: 2, kind: input, shape index: {}]
  %s3 = inlined_call_operand.hbm [shape: f32[2,16,256], index: 3, kind: output, shape index: {}]
  %s4 = sld [smem:[#allocation0]]
  $region49: #{tpu_custom_call.1} parent=0
    _
  %s6 = ssub.s32 1, %s4
  %s7 = scalar_select 0, %s6, %s4
  $region1: #{tpu_custom_call.1} parent=0
    #allocation2 [shape = 'u8[131072]{0}', space=vmem, size = 0x20000, scoped, tag = 'input window, operand 0']
    #allocation3 [shape = 's32[2]{0}', space=sflag, size = 0x8, scoped, tag = 'scoped memory for tpu_custom_call.1']
    #allocation4 [shape = 's32[2]{0}', space=sflag, size = 0x8, scoped, tag = 'scoped memory for tpu_custom_call.1']
    #allocation5 [shape = 'u8[32768]{0}', space=vmem, size = 0x8000, scoped, tag = 'output window, operand 0']
    %8 = vsyncpa [#allocation3], 0
    %s9 = scalar_lea.sflag [#allocation3], 1
    %10 = vsyncpa %s9, 0
    %11 = vsyncpa [#allocation4], 0
    %s12 = scalar_lea.sflag [#allocation4], 1
    %13 = vsyncpa %s12, 0
    loop: start=0, step=1, limit=4
    $region2: #{tpu_custom_call.1} parent=1 // loop_pre_header
      _
    $region3: #{tpu_custom_call.1} parent=1 // loop_header
      %s15 = sphi 0, %s19
      %p16 = scmp.ge.s32.totalorder %s15, 4
      %s22 = sphi 0, %s34
      %s23 = sphi 0, %s30
      %s24 = sphi 0, %s22
      %s25 = sphi 0, %s23
      %s26 = sphi 0, %s24
      %s27 = sphi 0, %s25
      %s39 = sphi 0, %s41
      %s42 = sphi 0, %s39
      %s43 = sphi 0, %s42
      %s59 = sphi 0, %s43
      %s63 = sphi 0, %s63
      %s65 = sphi 0, %s63
      %s66 = sphi 0, %s65
      %s80 = sphi 0, %s66
      %s84 = sphi 0, %s84
      %s86 = sphi 0, %s84
      %s87 = sphi 0, %s86
      %s101 = sphi 0, %s87
      %s109 = sphi 0, %s111
      %s112 = sphi 0, %s109
      %s113 = sphi 0, %s112
      %s129 = sphi 0, %s113
    $region4: #{tpu_custom_call.1} parent=1 // loop_header_branch
      %18 = sbr.rel (%p16) target = $region8
    $region5: #{tpu_custom_call.1} parent=1 // loop_body
      %s20 = ssub.s32 %s15, 1
      %s21 = ssub.s32 %s15, 2
      %s28 = sadd.s32 1, %s23
      %p29 = scmp.ge.s32.totalorder %s28, 1
      %s30 = scalar_select %p29, 0, %s28
      %s31 = sadd.s32 1, %s22
      %s32 = scalar_select %p29, %s31, %s22
      %p33 = scmp.ge.s32.totalorder %s32, 2
      %s34 = scalar_select %p33, 0, %s32
      %s35 = ssub.s32 %s22, %s34
      %s36 = ssub.s32 %s23, %s30
      %s37 = sor.u32 %s35, %s36
      %p38 = scmp.eq.s32.totalorder %s37, 0
      %s40 = sadd.s32 %s39, 1
      %s41 = scalar_select %p38, %s39, %s40
      %p44 = pneg %p38
      %p45 = scmp.eq.s32.totalorder %s15, 1
      %p46 = por %p44, %p45
      %p47 = scmp.ne.s32.totalorder %s39, %s42
      %p48 = scmp.eq.s32.totalorder %s15, 0
      %p49 = por %p47, %p48
      %p50 = scmp.ne.s32.totalorder %s39, %s42
      %p51 = scmp.eq.s32.totalorder %s20, 1
      %p52 = por %p50, %p51
      %p53 = scmp.ne.s32.totalorder %s42, %s43
      %p54 = scmp.eq.s32.totalorder %s20, 0
      %p55 = por %p53, %p54
      %p56 = scmp.ne.s32.totalorder %s42, %s43
      %p57 = scmp.eq.s32.totalorder %s21, 1
      %p58 = por %p56, %p57
      %p60 = scmp.ne.s32.totalorder %s43, %s59
      %p61 = scmp.eq.s32.totalorder %s21, 0
      %p62 = por %p60, %p61
      %s64 = sadd.s32 %s63, 1
      %p67 = scmp.eq.s32.totalorder %s15, 1
      %p68 = scmp.ne.s32.totalorder %s63, %s65
      %p69 = scmp.eq.s32.totalorder %s15, 0
      %p70 = por %p68, %p69
      %p71 = scmp.ne.s32.totalorder %s63, %s65
      %p72 = scmp.eq.s32.totalorder %s20, 1
      %p73 = por %p71, %p72
      %p74 = scmp.ne.s32.totalorder %s65, %s66
      %p75 = scmp.eq.s32.totalorder %s20, 0
      %p76 = por %p74, %p75
      %p77 = scmp.ne.s32.totalorder %s65, %s66
      %p78 = scmp.eq.s32.totalorder %s21, 1
      %p79 = por %p77, %p78
      %p81 = scmp.ne.s32.totalorder %s66, %s80
      %p82 = scmp.eq.s32.totalorder %s21, 0
      %p83 = por %p81, %p82
      %s85 = sadd.s32 %s84, 1
      %p88 = scmp.eq.s32.totalorder %s15, 1
      %p89 = scmp.ne.s32.totalorder %s84, %s86
      %p90 = scmp.eq.s32.totalorder %s15, 0
      %p91 = por %p89, %p90
      %p92 = scmp.ne.s32.totalorder %s84, %s86
      %p93 = scmp.eq.s32.totalorder %s20, 1
      %p94 = por %p92, %p93
      %p95 = scmp.ne.s32.totalorder %s86, %s87
      %p96 = scmp.eq.s32.totalorder %s20, 0
      %p97 = por %p95, %p96
      %p98 = scmp.ne.s32.totalorder %s86, %s87
      %p99 = scmp.eq.s32.totalorder %s21, 1
      %p100 = por %p98, %p99
      %p102 = scmp.ne.s32.totalorder %s87, %s101
      %p103 = scmp.eq.s32.totalorder %s21, 0
      %p104 = por %p102, %p103
      %s105 = ssub.s32 %s22, %s34
      %s106 = ssub.s32 %s23, %s30
      %s107 = sor.u32 %s105, %s106
      %p108 = scmp.eq.s32.totalorder %s107, 0
      %s110 = sadd.s32 %s109, 1
      %s111 = scalar_select %p108, %s109, %s110
      %p114 = pneg %p108
      %p115 = scmp.eq.s32.totalorder %s15, 1
      %p116 = por %p114, %p115
      %p117 = scmp.ne.s32.totalorder %s109, %s112
      %p118 = scmp.eq.s32.totalorder %s15, 0
      %p119 = por %p117, %p118
      %p120 = scmp.ne.s32.totalorder %s109, %s112
      %p121 = scmp.eq.s32.totalorder %s20, 1
      %p122 = por %p120, %p121
      %p123 = scmp.ne.s32.totalorder %s112, %s113
      %p124 = scmp.eq.s32.totalorder %s20, 0
      %p125 = por %p123, %p124
      %p126 = scmp.ne.s32.totalorder %s112, %s113
      %p127 = scmp.eq.s32.totalorder %s21, 1
      %p128 = por %p126, %p127
      %p130 = scmp.ne.s32.totalorder %s113, %s129
      %p131 = scmp.eq.s32.totalorder %s21, 0
      %p132 = por %p130, %p131
      %p133 = scmp.le.s32.totalorder 1, %s15
      %p134 = scmp.lt.s32.totalorder %s15, 3
      %p135 = pnand %p133, %p134
      %p136 = pneg %p135
      // Predicated region
      $region9: #{tpu_custom_call.1} parent=5 // pred_check
        _
      $region10: #{tpu_custom_call.1} parent=5 // pred_check_branch
        %138 = sbr.rel (%p135) target = $region12
      $region11: #{tpu_custom_call.1} parent=5 // pred_region
        %s139 = ssub.s32 %s15, 1
        // Predicated region
        $region13: #{tpu_custom_call.1} parent=11 // pred_check
          %p140 = pneg %p76
        $region14: #{tpu_custom_call.1} parent=11 // pred_check_branch
          %142 = sbr.rel (%p140) target = $region16
        $region15: #{tpu_custom_call.1} parent=11 // pred_region
          _
        $region16: #{tpu_custom_call.1} parent=11 // pred_fallthru
          _
        // Predicated region
        $region17: #{tpu_custom_call.1} parent=11 // pred_check
          %p143 = pneg %p97
        $region18: #{tpu_custom_call.1} parent=11 // pred_check_branch
          %145 = sbr.rel (%p143) target = $region20
        $region19: #{tpu_custom_call.1} parent=11 // pred_region
          _
        $region20: #{tpu_custom_call.1} parent=11 // pred_fallthru
          _
      $region12: #{tpu_custom_call.1} parent=5 // pred_fallthru
        _
      %p146 = scmp.lt.s32.totalorder %s15, 2
      // Predicated region
      $region21: #{tpu_custom_call.1} parent=5 // pred_check
        %p147 = pneg %p146
      $region22: #{tpu_custom_call.1} parent=5 // pred_check_branch
        %149 = sbr.rel (%p147) target = $region24
      $region23: #{tpu_custom_call.1} parent=5 // pred_region
        // Predicated region
        $region25: #{tpu_custom_call.1} parent=23 // pred_check
          %p150 = pneg %p49
        $region26: #{tpu_custom_call.1} parent=23 // pred_check_branch
          %152 = sbr.rel (%p150) target = $region28
        $region27: #{tpu_custom_call.1} parent=23 // pred_region
          %s153 = sand.u32 %s39, 1
          %s154 = scalar_lea.sflag [#allocation3], %s153
          %s155 = sand.u32 %s39, 1
          %s156 = smul.addr %s155, 128
          %s157 = scalar_lea.vmem [#allocation2], %s156
          %s158 = smul.u32 2, %s23
          %s160 = ssub.s32 2048, 2048
          %161 = vsyncadd %s154, %s160
          %s162 = smul.addr %s22, 32
          %s163 = sadd.s32 %s158, %s162
          %s164 = smul.addr %s163, 64
          %s165 = scalar_lea.hbm %s0, %s164
          %s166 = sshll.u32 %s157, 4
          %s167 = int_to_ptr.vmem [resolvable:$true] %s166
          %172 = dma.hbm_to_vmem [thread:$0]  %s165, 2048, %s167, %s154, 128, 128, 8
        $region28: #{tpu_custom_call.1} parent=23 // pred_fallthru
          _
      $region24: #{tpu_custom_call.1} parent=5 // pred_fallthru
        _
      %p173 = scmp.le.s32.totalorder 1, %s15
      %p174 = scmp.lt.s32.totalorder %s15, 3
      %p175 = pnand %p173, %p174
      %p176 = pneg %p175
      // Predicated region
      $region29: #{tpu_custom_call.1} parent=5 // pred_check
        _
      $region30: #{tpu_custom_call.1} parent=5 // pred_check_branch
        %178 = sbr.rel (%p175) target = $region32
      $region31: #{tpu_custom_call.1} parent=5 // pred_region
        %s179 = ssub.s32 %s15, 1
        %s180 = sand.u32 %s42, 1
        %s181 = scalar_lea.sflag [#allocation3], %s180
        %s182 = sand.u32 %s42, 1
        %s183 = smul.addr %s182, 128
        %s184 = scalar_lea.vmem [#allocation2], %s183
        // Predicated region
        $region33: #{tpu_custom_call.1} parent=31 // pred_check
          %p185 = pneg %p55
        $region34: #{tpu_custom_call.1} parent=31 // pred_check_branch
          %187 = sbr.rel (%p185) target = $region36
        $region35: #{tpu_custom_call.1} parent=31 // pred_region
          %188 = dma.done %s181, 2048
        $region36: #{tpu_custom_call.1} parent=31 // pred_fallthru
          _
        %s189 = sand.u32 %s42, 1
        %s190 = scalar_lea.sflag [#allocation3], %s189
        %s191 = sand.u32 %s42, 1
        %s192 = smul.addr %s191, 128
        %s193 = scalar_lea.vmem [#allocation2], %s192
        %p194 = pneg %p55
        %p195 = pneg %p52
        %p196 = pneg %p76
        %p197 = pneg %p73
        %p198 = pneg %p97
        %p199 = pneg %p94
        %p200 = pneg %p125
        %p201 = pneg %p122
        %s202 = sand.u32 %s112, 1
        %s203 = scalar_lea.sflag [#allocation4], %s202
        %s204 = sand.u32 %s112, 1
        %s205 = smul.addr %s204, 32
        %s206 = scalar_lea.vmem [#allocation5], %s205
        %s207 = smul.u32 2, %s25
        %s208 = smul.u32 2, %s25
        %v210 = vld [vmem:[%s1] sm:$0xf]
        %v211 = vld [vmem:[%s1 + $0x4] sm:$0xf]
        %v212 = vld [vmem:[%s184] sm:$0xff]
        %v213 = vld [vmem:[%s184 + $0x8] sm:$0xff]
        %v214 = vld [vmem:[%s184 + $0x10] sm:$0xff]
        %v215 = vld [vmem:[%s184 + $0x18] sm:$0xff]
        %v216 = vld [vmem:[%s184 + $0x20] sm:$0xff]
        %v217 = vld [vmem:[%s184 + $0x28] sm:$0xff]
        %v218 = vld [vmem:[%s184 + $0x30] sm:$0xff]
        %v219 = vld [vmem:[%s184 + $0x38] sm:$0xff]
        %v220 = vld [vmem:[%s184 + $0x40] sm:$0xff]
        %v221 = vld [vmem:[%s184 + $0x48] sm:$0xff]
        %v222 = vld [vmem:[%s184 + $0x50] sm:$0xff]
        %v223 = vld [vmem:[%s184 + $0x58] sm:$0xff]
        %v224 = vld [vmem:[%s184 + $0x60] sm:$0xff]
        %v225 = vld [vmem:[%s184 + $0x68] sm:$0xff]
        %v226 = vld [vmem:[%s184 + $0x70] sm:$0xff]
        %v227 = vld [vmem:[%s184 + $0x78] sm:$0xff]
        %v228 = vld [vmem:[%s2] sm:$0xff]
        %v229 = vld [vmem:[%s2 + $0x8] sm:$0xff]
        %231 = vset.pattern.permute.xlu0 0
        %232 = vperm.xlu0 %231, %v228
        %v233 = vpop.permute.xlu0 %232
        %236 = vset.pattern.permute.xlu0 0
        %237 = vperm.xlu0 %236, %v229
        %v238 = vpop.permute.xlu0 %237
        %v242 = vunpack.c.l.b16 %v210
        %v243 = vunpack.c.l.b16 %v211
        %v244 = vpack.c.b16 %v243, %v242
        %v262 = vunpack.c.l.b16 %v212
        %v263 = vunpack.c.h.b16 %v212
        %v264 = vunpack.c.l.b16 %v213
        %v265 = vunpack.c.h.b16 %v213
        %v266 = vunpack.c.l.b16 %v214
        %v267 = vunpack.c.h.b16 %v214
        %v268 = vunpack.c.l.b16 %v215
        %v269 = vunpack.c.h.b16 %v215
        %v270 = vunpack.c.l.b16 %v216
        %v271 = vunpack.c.h.b16 %v216
        %v272 = vunpack.c.l.b16 %v217
        %v273 = vunpack.c.h.b16 %v217
        %v274 = vunpack.c.l.b16 %v218
        %v275 = vunpack.c.h.b16 %v218
        %v276 = vunpack.c.l.b16 %v219
        %v277 = vunpack.c.h.b16 %v219
        %v278 = vunpack.c.l.b16 %v220
        %v279 = vunpack.c.h.b16 %v220
        %v280 = vunpack.c.l.b16 %v221
        %v281 = vunpack.c.h.b16 %v221
        %v282 = vunpack.c.l.b16 %v222
        %v283 = vunpack.c.h.b16 %v222
        %v284 = vunpack.c.l.b16 %v223
        %v285 = vunpack.c.h.b16 %v223
        %v286 = vunpack.c.l.b16 %v224
        %v287 = vunpack.c.h.b16 %v224
        %v288 = vunpack.c.l.b16 %v225
        %v289 = vunpack.c.h.b16 %v225
        %v290 = vunpack.c.l.b16 %v226
        %v291 = vunpack.c.h.b16 %v226
        %v292 = vunpack.c.l.b16 %v227
        %v293 = vunpack.c.h.b16 %v227
        %v294 = vpack.c.b16 %v264, %v262
        %v295 = vpack.c.b16 %v265, %v263
        %v296 = vpack.c.b16 %v268, %v266
        %v297 = vpack.c.b16 %v269, %v267
        %v298 = vpack.c.b16 %v272, %v270
        %v299 = vpack.c.b16 %v273, %v271
        %v300 = vpack.c.b16 %v276, %v274
        %v301 = vpack.c.b16 %v277, %v275
        %v302 = vpack.c.b16 %v280, %v278
        %v303 = vpack.c.b16 %v281, %v279
        %v304 = vpack.c.b16 %v284, %v282
        %v305 = vpack.c.b16 %v285, %v283
        %v306 = vpack.c.b16 %v288, %v286
        %v307 = vpack.c.b16 %v289, %v287
        %v308 = vpack.c.b16 %v292, %v290
        %v309 = vpack.c.b16 %v293, %v291
        %326 = vmatprep.subr.bf16.mxu0 %v309
        %327 = vmatpush1.bf16.msra.mxu0 %v308
        %328 = vmatprep.subr.bf16.mxu0 %v307
        %329 = vmatpush1.bf16.msra.mxu0 %v306
        %330 = vmatprep.subr.bf16.mxu0 %v305
        %331 = vmatpush1.bf16.msra.mxu0 %v304
        %332 = vmatprep.subr.bf16.mxu0 %v303
        %333 = vmatpush1.bf16.msra.mxu0 %v302
        %334 = vmatprep.subr.bf16.mxu0 %v301
        %335 = vmatpush1.bf16.msra.mxu0 %v300
        %336 = vmatprep.subr.bf16.mxu0 %v299
        %337 = vmatpush1.bf16.msra.mxu0 %v298
        %338 = vmatprep.subr.bf16.mxu0 %v297
        %339 = vmatpush1.bf16.msra.mxu0 %v296
        %340 = vmatprep.subr.bf16.mxu0 %v295
        %341 = vmatpush1.bf16.msra.mxu0 %v294
        %342 = vmatprep.subr.bf16.mxu0 0
        %343 = vmatpush2.bf16.msra.mxu0 0
        %344 = vmatprep.subr.bf16.mxu0 0
        %345 = vmatpush2.bf16.msra.mxu0 0
        %346 = vmatprep.subr.bf16.mxu0 0
        %347 = vmatpush2.bf16.msra.mxu0 0
        %348 = vmatprep.subr.bf16.mxu0 0
        %349 = vmatpush2.bf16.msra.mxu0 0
        %350 = vmatprep.subr.bf16.mxu0 0
        %351 = vmatpush2.bf16.msra.mxu0 0
        %352 = vmatprep.subr.bf16.mxu0 0
        %353 = vmatpush2.bf16.msra.mxu0 0
        %354 = vmatprep.subr.bf16.mxu0 0
        %355 = vmatpush2.bf16.msra.mxu0 0
        %356 = vmatprep.subr.bf16.mxu0 0
        %357 = vmatpush2.bf16.msra.mxu0 0
        %358 = vmatprep.mubr.bf16.mxu0 0
        %359 = vmatmul.mubr.bf16.gmra.mxu0 %v244
        %v360 = vpop.f32.mrf.mxu0
        %v361 = vadd.f32 %v233, %v360
        %v362 = vpop.f32.mrf.mxu0
        %v363 = vadd.f32 %v233, %v362
        %v364 = vpop.f32.mrf.mxu0
        %v365 = vadd.f32 %v238, %v364
        %v366 = vpop.f32.mrf.mxu0
        %v367 = vadd.f32 %v238, %v366
        %368 = vdwg.mxu0
        %369 = vst [vmem:[%s206] sm:$0xff] %v361
        %370 = vst [vmem:[%s206 + $0x8] sm:$0xff] %v363
        %371 = vst [vmem:[%s206 + $0x10] sm:$0xff] %v365
        %372 = vst [vmem:[%s206 + $0x18] sm:$0xff] %v367
        %s373 = sand.u32 %s112, 1
        %s374 = scalar_lea.sflag [#allocation4], %s373
        %s375 = sand.u32 %s112, 1
        %s376 = smul.addr %s375, 32
        %s377 = scalar_lea.vmem [#allocation5], %s376
        // Predicated region
        $region37: #{tpu_custom_call.1} parent=31 // pred_check
          %p378 = pneg %p122
        $region38: #{tpu_custom_call.1} parent=31 // pred_check_branch
          %380 = sbr.rel (%p378) target = $region40
        $region39: #{tpu_custom_call.1} parent=31 // pred_region
          %s381 = smul.u32 2, %s25
          %s383 = ssub.s32 512, 512
          %384 = vsyncadd %s374, %s383
          %s385 = smul.addr %s24, 4
          %s386 = sadd.s32 %s381, %s385
          %s387 = smul.addr %s386, 128
          %s388 = scalar_lea.hbm %s3, %s387
          %s389 = sshll.u32 %s377, 4
          %s390 = int_to_ptr.vmem [resolvable:$true] %s389
          %395 = dma.vmem_to_hbm [thread:$0]  %s390, 512, %s388, %s374, 256, 256, 16
        $region40: #{tpu_custom_call.1} parent=31 // pred_fallthru
          _
      $region32: #{tpu_custom_call.1} parent=5 // pred_fallthru
        _
      %p396 = scmp.le.s32.totalorder 2, %s15
      // Predicated region
      $region41: #{tpu_custom_call.1} parent=5 // pred_check
        %p397 = pneg %p396
      $region42: #{tpu_custom_call.1} parent=5 // pred_check_branch
        %399 = sbr.rel (%p397) target = $region44
      $region43: #{tpu_custom_call.1} parent=5 // pred_region
        %s400 = ssub.s32 %s15, 2
        // Predicated region
        $region45: #{tpu_custom_call.1} parent=43 // pred_check
          %p401 = pneg %p128
        $region46: #{tpu_custom_call.1} parent=43 // pred_check_branch
          %403 = sbr.rel (%p401) target = $region48
        $region47: #{tpu_custom_call.1} parent=43 // pred_region
          %s404 = sand.u32 %s113, 1
          %s405 = scalar_lea.sflag [#allocation4], %s404
          %s406 = sand.u32 %s113, 1
          %s407 = smul.addr %s406, 32
          %s408 = scalar_lea.vmem [#allocation5], %s407
          %409 = dma.done %s405, 512
        $region48: #{tpu_custom_call.1} parent=43 // pred_fallthru
          _
      $region44: #{tpu_custom_call.1} parent=5 // pred_fallthru
        _
    $region6: #{tpu_custom_call.1} parent=1 // loop_footer
      %s19 = sadd.s32 1, %s15
    $region7: #{tpu_custom_call.1} parent=1 // loop_footer_branch
      %14 = sbr.rel target = $region3
    $region8: #{tpu_custom_call.1} parent=1 // loop_exit
      _
    %410 = vsyncpa [#allocation3], 1
    %s411 = scalar_lea.sflag [#allocation3], 1
    %412 = vsyncpa %s411, 1
    %413 = vsyncpa [#allocation4], 1
    %s414 = scalar_lea.sflag [#allocation4], 1
    %415 = vsyncpa %s414, 1

</llo_original>
